<compile_context>
chip_gen: v7x
topology: tpu7x:2x2x1
jax: 0.10.0
libtpu: 0.0.40
codegen_flags: <defaults>
</compile_context>

<pallas_src>
import math

import jax
import jax.numpy as jnp
from jax import lax
from jax.experimental import pallas as pl
from jax.experimental.pallas import tpu as pltpu


# ---------------------------------------------------------------------------
# Small helpers
# ---------------------------------------------------------------------------
def _pick_tile(n, candidates):
    """Largest candidate tile that evenly divides n, else the full extent."""
    for c in candidates:
        if c <= n and n % c == 0:
            return c
    return n


def _spec(block_shape, index_map, buffer_count=None):
    """BlockSpec with optional explicit buffering (single-buffer grid-invariant
    operands); falls back to a plain BlockSpec if pipeline_mode is unsupported."""
    if buffer_count is not None:
        try:
            return pl.BlockSpec(block_shape, index_map,
                                pipeline_mode=pl.Buffered(buffer_count))
        except Exception:  # pragma: no cover - older/newer API without pipeline_mode
            pass
    return pl.BlockSpec(block_shape, index_map)


def _vmem_capacity_bytes():
    try:
        return int(pltpu.get_tpu_info().vmem_capacity_bytes)
    except Exception:
        return 64 * 1024 * 1024   # conservative (v7x per-core sized) fallback


def _compiler_params(dim_sem):
    cap = _vmem_capacity_bytes()
    return pltpu.CompilerParams(
        dimension_semantics=dim_sem,
        vmem_limit_bytes=int(min(0.7 * cap, 100 * 1024 * 1024)))


# ---------------------------------------------------------------------------
# Fused linear projection kernel:  y = x @ W_t + b   (bf16 in, f32 acc)
#   grid = (Cout tiles, row tiles): the (possibly 2C-wide) weight streams per
#   outer step and is NOT fully resident; rows stream on the inner axis.
# ---------------------------------------------------------------------------
def linear_pallas(x2d, w_t, b, out_dtype=jnp.bfloat16):
    """x2d: (N, Cin) bf16, w_t: (Cin, Cout) bf16, b: (1, Cout) f32 -> (N, Cout)."""
    N, Cin = x2d.shape
    Cout = w_t.shape[1]
    tl = _pick_tile(N, (512, 256, 128, 64, 32, 16, 8))
    tn = _pick_tile(Cout, (1024, 512, 256, 128))

    def kernel(x_ref, w_ref, b_ref, o_ref):
        y = jnp.dot(x_ref[...], w_ref[...], preferred_element_type=jnp.float32)
        o_ref[...] = (y + b_ref[...]).astype(o_ref.dtype)

    return pl.pallas_call(
        kernel,
        out_shape=jax.ShapeDtypeStruct((N, Cout), out_dtype),
        grid_spec=pltpu.PrefetchScalarGridSpec(
            num_scalar_prefetch=0,
            grid=(Cout // tn, N // tl),
            in_specs=[
                pl.BlockSpec((tl, Cin), lambda j, i: (i, 0)),
                # weight/bias blocks are invariant across the inner (row) axis:
                # keep a single buffer to halve their VMEM residency.
                _spec((Cin, tn), lambda j, i: (0, j), buffer_count=1),
                _spec((1, tn), lambda j, i: (0, j), buffer_count=1),
            ],
            out_specs=pl.BlockSpec((tl, tn), lambda j, i: (i, j)),
        ),
        compiler_params=_compiler_params(("parallel", "parallel")),
    )(x2d, w_t, b)


# ---------------------------------------------------------------------------
# Attention kernels (fused output projection, channel-minor layout)
# ---------------------------------------------------------------------------
def _flash_vmem_bytes(tq, tk, C, nh):
    lane = 128
    cq = max(C, lane)
    ckv = max(2 * C, lane)
    ct = max(tk, lane)
    blocks = 2 * (tq * cq * 2) + 2 * (tk * ckv * 2) + 2 * (tq * cq * 2)  # q, kv, out
    weights = C * cq * 2 + cq * 4                                        # wo (1 buf) + bo
    scratch = tq * cq * 4 + 2 * tq * lane * 4                            # acc + m + l
    temps = 3 * tq * ct * 4                                              # s/p + headroom
    return blocks + weights + scratch + temps


def _choose_attn_tiles(Lq, Lk, C, nh, batch):
    budget = int(0.45 * _vmem_capacity_bytes())
    cands = (256, 128, 64, 32, 16, 8)
    q_cands = [c for c in cands if c <= Lq and Lq % c == 0] or [Lq]
    k_cands = [c for c in cands if c <= Lk and Lk % c == 0] or [Lk]
    tq, tk = q_cands[-1], k_cands[-1]
    found = False
    for cq in q_cands:            # prefer large tq, then largest tk that fits
        for ck in k_cands:
            if _flash_vmem_bytes(cq, ck, C, nh) <= budget:
                tq, tk = cq, ck
                found = True
                break
        if found:
            break
    # v7x megacore: keep at least 2 parallel grid steps so both TCs have work.
    if batch * (Lq // tq) < 2:
        for cq in q_cands:
            if cq < tq:
                tq = cq
                break
    return tq, tk


def flash_mha_pallas(q, kvp, wo_t, bo, nh, hd, tq=None, tk=None):
    """Multi-head attention + fused output projection.

    q:    (B, Lq, C)  bf16 (softmax scale pre-folded into the Q projection)
    kvp:  (B, Lk, 2C) bf16 fused K/V projection ([:, :, :C]=K, [:, :, C:]=V)
    wo_t: (C, C) bf16 (out_proj.weight^T),  bo: (1, C) f32
    Returns (B, Lq, C) bf16.
    """
    B, Lq, C = q.shape
    Lk = kvp.shape[1]
    assert kvp.shape[2] == 2 * C and nh * hd == C
    atq, atk = _choose_attn_tiles(Lq, Lk, C, nh, B)
    tq = atq if tq is None else tq
    tk = atk if tk is None else tk
    nkv = Lk // tk

    def head(ref, h, base):
        # static lane slice of the current block: (rows, hd)
        return ref[0, :, base + h * hd: base + (h + 1) * hd]

    out_shape = jax.ShapeDtypeStruct((B, Lq, C), jnp.bfloat16)
    q_spec3 = pl.BlockSpec((1, tq, C), lambda b, qi, ki: (b, qi, 0))
    kv_spec3 = pl.BlockSpec((1, tk, 2 * C), lambda b, qi, ki: (b, ki, 0))
    wo_spec3 = _spec((C, C), lambda b, qi, ki: (0, 0), buffer_count=1)
    bo_spec3 = _spec((1, C), lambda b, qi, ki: (0, 0), buffer_count=1)
    out_spec3 = pl.BlockSpec((1, tq, C), lambda b, qi, ki: (b, qi, 0))

    if nkv == 1:
        # ------- fast path: single K/V tile, plain softmax, no online bookkeeping
        def kernel(q_ref, kv_ref, wo_ref, bo_ref, o_ref, acc_sc):
            for h in range(nh):
                q_h = head(q_ref, h, 0)                       # (tq, hd) bf16
                k_h = head(kv_ref, h, 0)                      # (tk, hd) bf16
                v_h = head(kv_ref, h, C)                      # (tk, hd) bf16
                s = lax.dot_general(q_h, k_h, (((1,), (1,)), ((), ())),
                                    preferred_element_type=jnp.float32)
                p = jnp.exp(s - jnp.max(s, axis=-1, keepdims=True))
                l = jnp.sum(p, axis=-1, keepdims=True)
                o_h = jnp.dot(p.astype(v_h.dtype), v_h,
                              preferred_element_type=jnp.float32)
                acc_sc[:, h * hd:(h + 1) * hd] = o_h * pl.reciprocal(l, approx=True)
            # fused output projection: one lane-dense (tq, C) @ (C, C) matmul
            y = jnp.dot(acc_sc[...].astype(wo_ref.dtype), wo_ref[...],
                        preferred_element_type=jnp.float32)
            o_ref[0] = (y + bo_ref[...]).astype(o_ref.dtype)

        return pl.pallas_call(
            kernel,
            out_shape=out_shape,
            grid_spec=pltpu.PrefetchScalarGridSpec(
                num_scalar_prefetch=0,
                grid=(B, Lq // tq),
                in_specs=[
                    pl.BlockSpec((1, tq, C), lambda b, qi: (b, qi, 0)),
                    pl.BlockSpec((1, tk, 2 * C), lambda b, qi: (b, 0, 0)),
                    _spec((C, C), lambda b, qi: (0, 0), buffer_count=1),
                    _spec((1, C), lambda b, qi: (0, 0), buffer_count=1),
                ],
                out_specs=pl.BlockSpec((1, tq, C), lambda b, qi: (b, qi, 0)),
                scratch_shapes=[pltpu.VMEM((tq, C), jnp.float32)],
            ),
            compiler_params=_compiler_params(("parallel", "parallel")),
        )(q, kvp, wo_t, bo)

    # ------- general path: online softmax across K/V tiles
    def kernel(q_ref, kv_ref, wo_ref, bo_ref, o_ref, m_sc, l_sc, acc_sc):
        ki = pl.program_id(2)

        @pl.when(ki == 0)
        def _():
            m_sc[...] = jnp.full(m_sc.shape, -jnp.inf, jnp.float32)
            l_sc[...] = jnp.zeros(l_sc.shape, jnp.float32)
            acc_sc[...] = jnp.zeros(acc_sc.shape, jnp.float32)

        for h in range(nh):
            sl = slice(h * hd, (h + 1) * hd)
            q_h = head(q_ref, h, 0)
            k_h = head(kv_ref, h, 0)
            v_h = head(kv_ref, h, C)
            s = lax.dot_general(q_h, k_h, (((1,), (1,)), ((), ())),
                                preferred_element_type=jnp.float32)    # (tq, tk)
            m_prev = m_sc[:, h:h + 1]
            m_new = jnp.maximum(m_prev, jnp.max(s, axis=-1, keepdims=True))
            alpha = jnp.exp(m_prev - m_new)
            p = jnp.exp(s - m_new)
            l_sc[:, h:h + 1] = alpha * l_sc[:, h:h + 1] + jnp.sum(p, axis=-1,
                                                                  keepdims=True)
            pv = jnp.dot(p.astype(v_h.dtype), v_h,
                         preferred_element_type=jnp.float32)           # (tq, hd)
            acc_sc[:, sl] = alpha * acc_sc[:, sl] + pv
            m_sc[:, h:h + 1] = m_new

        @pl.when(ki == nkv - 1)
        def _():
            for h in range(nh):
                sl = slice(h * hd, (h + 1) * hd)
                acc_sc[:, sl] = acc_sc[:, sl] * pl.reciprocal(l_sc[:, h:h + 1],
                                                              approx=True)
            # fused output projection contracts head and hd at once (lane-dense acc)
            y = jnp.dot(acc_sc[...].astype(wo_ref.dtype), wo_ref[...],
                        preferred_element_type=jnp.float32)
            o_ref[0] = (y + bo_ref[...]).astype(o_ref.dtype)

    return pl.pallas_call(
        kernel,
        out_shape=out_shape,
        grid_spec=pltpu.PrefetchScalarGridSpec(
            num_scalar_prefetch=0,
            grid=(B, Lq // tq, nkv),
            in_specs=[q_spec3, kv_spec3, wo_spec3, bo_spec3],
            out_specs=out_spec3,
            scratch_shapes=[
                pltpu.VMEM((tq, nh), jnp.float32),    # running max m (head = lane)
                pltpu.VMEM((tq, nh), jnp.float32),    # running denom l
                pltpu.VMEM((tq, C), jnp.float32),     # lane-dense unnormalized acc
            ],
        ),
        compiler_params=_compiler_params(("parallel", "parallel", "arbitrary")),
    )(q, kvp, wo_t, bo)


# ---------------------------------------------------------------------------
# Parameter packing (PyTorch nn.MultiheadAttention layout -> kernel layout)
# ---------------------------------------------------------------------------
def pack_attention2d_params(in_proj_w, in_proj_b, out_proj_w, out_proj_b, nhead):
    three_c, c = in_proj_w.shape
    assert three_c == 3 * c and c % nhead == 0
    hd = c // nhead
    scale = 1.0 / math.sqrt(hd)
    wq, wk, wv = in_proj_w[:c], in_proj_w[c:2 * c], in_proj_w[2 * c:]
    bq, bk, bv = in_proj_b[:c], in_proj_b[c:2 * c], in_proj_b[2 * c:]
    return {
        "nhead": nhead,
        "head_dim": hd,
        "c": c,
        # softmax scale folded into the (pre-transposed) query projection
        "wq_t": (wq.T * scale).astype(jnp.bfloat16),
        "bq": (bq * scale).reshape(1, c).astype(jnp.float32),
        # K and V fused into one (C, 2C) pre-transposed weight -> one matmul
        "wkv_t": jnp.concatenate([wk.T, wv.T], axis=1).astype(jnp.bfloat16),
        "bkv": jnp.concatenate([bk, bv]).reshape(1, 2 * c).astype(jnp.float32),
        # output projection (C, C); heads are contracted in one matmul in-kernel
        "wo_t": out_proj_w.T.astype(jnp.bfloat16),
        "bo": out_proj_b.reshape(1, c).astype(jnp.float32),
    }


def init_attention2d_params(key, c, nhead):
    """Deterministic synthetic weights matching nn.MultiheadAttention(c, nhead, bias=True)."""
    k1, k2, k3, k4 = jax.random.split(key, 4)
    bound_in = math.sqrt(6.0 / (c + 3 * c))            # xavier_uniform on (3c, c)
    in_proj_w = jax.random.uniform(k1, (3 * c, c), jnp.float32, -bound_in, bound_in)
    in_proj_b = jax.random.uniform(k2, (3 * c,), jnp.float32, -0.1, 0.1)
    bound_out = 1.0 / math.sqrt(c)
    out_proj_w = jax.random.uniform(k3, (c, c), jnp.float32, -bound_out, bound_out)
    out_proj_b = jax.random.uniform(k4, (c,), jnp.float32, -0.1, 0.1)
    return pack_attention2d_params(in_proj_w, in_proj_b, out_proj_w, out_proj_b, nhead)


# ---------------------------------------------------------------------------
# Forward (mirrors Attention2D.forward)
# ---------------------------------------------------------------------------
def _project_q(xs, params):
    B, Lq, C = xs.shape
    q = linear_pallas(xs.reshape(B * Lq, C).astype(jnp.bfloat16),
                      params["wq_t"], params["bq"])
    return q.reshape(B, Lq, C)                         # (B, Lq, C) bf16, scale folded


def _project_kv(kvseg, params):
    B, L, C = kvseg.shape
    kvp = linear_pallas(kvseg.reshape(B * L, C).astype(jnp.bfloat16),
                        params["wkv_t"], params["bkv"])
    return kvp.reshape(B, L, 2 * C)                    # (B, L, 2C) bf16 fused K|V


def attention2d_forward(x, kv, params, self_attn=False, style=False,
                        img_style=False, clip_size=4):
    """x: (B, C, H, W) NCHW, kv: (B, Lk, C). Returns (B, C, H, W) f32."""
    B, C, H, W = x.shape
    nh, hd = params["nhead"], params["head_dim"]
    xs = x.reshape(B, C, H * W).transpose(0, 2, 1)     # (B, HW, C)
    if self_attn:
        kv = jnp.concatenate([xs, kv], axis=1)
    cs = clip_size

    # Q projection computed once and reused across all attention calls.
    q = _project_q(xs, params)

    def attend(kvp):
        return flash_mha_pallas(q, kvp, params["wo_t"], params["bo"], nh, hd)

    if style:
        mean_blk = jnp.broadcast_to(kv[:, -cs:, :].mean(axis=1, keepdims=True),
                                    (B, cs, C))
        # KV dedup: project the shared [A, B] prefix once and the mean block once.
        kv_ab = _project_kv(kv[:, :-cs, :], params)            # proj([A, B])
        kv_m = _project_kv(mean_blk, params)                   # proj(mean block)
        kv_a = kv_ab[:, :-cs, :]                               # proj(A) (slice only)
        x_txt = attend(kv_ab)                                  # attn over [A, B]
        x_txt_style = attend(jnp.concatenate([kv_ab, kv_m], axis=1))   # [A, B, mean]
        x_style = attend(jnp.concatenate([kv_a, kv_m], axis=1))        # [A, mean]
        out = (x_txt.astype(jnp.float32) + x_txt_style.astype(jnp.float32)
               + x_style.astype(jnp.float32)) / 3.0
    elif img_style:
        mean_blk = jnp.broadcast_to(kv[:, -cs:, :].mean(axis=1, keepdims=True),
                                    (B, cs, C))
        kv_ab = _project_kv(kv[:, :-cs, :], params)            # proj([A, B])
        kv_m = _project_kv(mean_blk, params)
        kv_a = kv_ab[:, :-cs, :]
        x_txt = attend(kv_a)                                   # [A]
        x_sub = attend(kv_ab)                                  # [A, B]
        x_sub_style = attend(jnp.concatenate([kv_ab, kv_m], axis=1))   # [A, B, mean]
        x_style = attend(jnp.concatenate([kv_a, kv_m], axis=1))        # [A, mean]
        out = (x_txt.astype(jnp.float32) + x_sub.astype(jnp.float32)
               + x_style.astype(jnp.float32) + x_sub_style.astype(jnp.float32)) / 4.0
    else:
        out = attend(_project_kv(kv, params)).astype(jnp.float32)

    return out.transpose(0, 2, 1).reshape(B, C, H, W)


# ---------------------------------------------------------------------------
# Pure-JAX reference (same bf16 weight/input rounding) for correctness checks
# ---------------------------------------------------------------------------
def _mha_reference(xs, kv, params):
    nh, hd, C = params["nhead"], params["head_dim"], params["c"]
    x32 = xs.astype(jnp.bfloat16).astype(jnp.float32)
    kv32 = kv.astype(jnp.bfloat16).astype(jnp.float32)
    wq = params["wq_t"].astype(jnp.float32)
    wkv = params["wkv_t"].astype(jnp.float32)
    wo = params["wo_t"].astype(jnp.float32)
    q = x32 @ wq + params["bq"]
    kvp = kv32 @ wkv + params["bkv"]
    k, v = kvp[..., :C], kvp[..., C:]
    B, Lq, _ = xs.shape
    Lk = kv.shape[1]
    qh = q.reshape(B, Lq, nh, hd).transpose(0, 2, 1, 3)
    kh = k.reshape(B, Lk, nh, hd).transpose(0, 2, 1, 3)
    vh = v.reshape(B, Lk, nh, hd).transpose(0, 2, 1, 3)
    s = jnp.einsum("bhqd,bhkd->bhqk", qh, kh)
    p = jax.nn.softmax(s, axis=-1)
    o = jnp.einsum("bhqk,bhkd->bhqd", p, vh)
    o = o.transpose(0, 2, 1, 3).reshape(B, Lq, C)
    return o @ wo + params["bo"]


def attention2d_reference(x, kv, params, self_attn=False, style=False,
                          img_style=False, clip_size=4):
    B, C, H, W = x.shape
    xs = x.reshape(B, C, H * W).transpose(0, 2, 1)
    if self_attn:
        kv = jnp.concatenate([xs, kv], axis=1)
    cs = clip_size
    if style:
        mean = kv[:, -cs:, :].mean(axis=1, keepdims=True)
        kv = kv.at[:, -cs:, :].set(jnp.broadcast_to(mean, (B, cs, C)))
        x_txt = _mha_reference(xs, kv[:, :-cs, :], params)
        x_txt_style = _mha_reference(xs, kv, params)
        kv = kv.at[:, -2 * cs:-cs, :].set(kv[:, -cs:, :])
        x_style = _mha_reference(xs, kv[:, :-cs, :], params)
        out = (x_txt + x_txt_style + x_style) / 3.0
    elif img_style:
        mean = kv[:, -cs:, :].mean(axis=1, keepdims=True)
        x_txt = _mha_reference(xs, kv[:, :-2 * cs, :], params)
        x_sub = _mha_reference(xs, kv[:, :-cs, :], params)
        kv = kv.at[:, -cs:, :].set(jnp.broadcast_to(mean, (B, cs, C)))
        x_sub_style = _mha_reference(xs, kv, params)
        kv = kv.at[:, -2 * cs:-cs, :].set(jnp.broadcast_to(mean, (B, cs, C)))
        x_style = _mha_reference(xs, kv[:, :-cs, :], params)
        out = (x_txt + x_sub + x_style + x_sub_style) / 4.0
    else:
        out = _mha_reference(xs, kv, params)
    return out.transpose(0, 2, 1).reshape(B, C, H, W)


if __name__ == "__main__":
    B, C, H, W = 2, 32, 4, 4
    nhead = 4
    Lk = 16
    clip = 4

    key = jax.random.PRNGKey(0)
    kx, kkv, kp = jax.random.split(key, 3)
    x = jax.random.normal(kx, (B, C, H, W), jnp.float32)
    kv = jax.random.normal(kkv, (B, Lk, C), jnp.float32)
    params = init_attention2d_params(kp, C, nhead)

    def check(name, out, ref):
        assert out.shape == ref.shape, name
        assert bool(jnp.all(jnp.isfinite(out))), name
        tol = 0.08 * max(1.0, float(jnp.max(jnp.abs(ref))))      # max-normalized
        err = float(jnp.max(jnp.abs(out.astype(jnp.float32) - ref)))
        assert err < tol, f"{name}: max|err|={err} tol={tol}"

    # default (cross-attention) path: single K/V tile -> fast-path kernel
    out = jax.block_until_ready(attention2d_forward(x, kv, params))
    check("default", out, attention2d_reference(x, kv, params))

    # self-attention path (longer K/V)
    out_sa = jax.block_until_ready(attention2d_forward(x, kv, params, self_attn=True))
    check("self_attn", out_sa, attention2d_reference(x, kv, params, self_attn=True))

    # style branch (exercises the shared-KV projection dedup across 3 attends)
    out_st = jax.block_until_ready(
        attention2d_forward(x, kv, params, style=True, clip_size=clip))
    check("style", out_st,
          attention2d_reference(x, kv, params, style=True, clip_size=clip))

    # img_style branch (4 attends; att_map intentionally not materialized)
    out_ist = jax.block_until_ready(
        attention2d_forward(x, kv, params, img_style=True, clip_size=clip))
    check("img_style", out_ist,
          attention2d_reference(x, kv, params, img_style=True, clip_size=clip))

    # explicitly exercise the multi-K/V-tile online-softmax kernel (tk forced small)
    xs = x.reshape(B, C, H * W).transpose(0, 2, 1)
    kv_sa = jnp.concatenate([xs, kv], axis=1)
    qh = _project_q(xs, params)
    kvp = _project_kv(kv_sa, params)
    o_fast = flash_mha_pallas(qh, kvp, params["wo_t"], params["bo"],
                              params["nhead"], params["head_dim"])
    o_flash = flash_mha_pallas(qh, kvp, params["wo_t"], params["bo"],
                               params["nhead"], params["head_dim"], tk=8)
    jax.block_until_ready(o_flash)
    err = float(jnp.max(jnp.abs(o_fast.astype(jnp.float32)
                                - o_flash.astype(jnp.float32))))
    assert err < 0.05, f"online-softmax path mismatch: {err}"

    print("KERNEL_OK")
</pallas_src>

<mosaic_0001>
module attributes {stable_mosaic.version = 11 : i64} {
  func.func @kernel(%arg0: i32, %arg1: i32, %arg2: memref<32x32xbf16, #tpu.memory_space<vmem>>, %arg3: memref<32x32xbf16, #tpu.memory_space<vmem>>, %arg4: memref<1x32xf32, #tpu.memory_space<vmem>>, %arg5: memref<32x32xbf16, #tpu.memory_space<vmem>>) attributes {dimension_semantics = [#tpu.dimension_semantics<parallel>, #tpu.dimension_semantics<parallel>], iteration_bounds = array<i64: 1, 1>, scalar_prefetch = 0 : i64, scratch_operands = 0 : i64, tpu.core_type = #tpu.core_type<tc>, window_params = [{transform_indices = @transform_0, window_bounds = array<i64: 32, 32>}, {pipeline_mode = #tpu.pipeline_mode<synchronous>, transform_indices = @transform_1, window_bounds = array<i64: 32, 32>}, {pipeline_mode = #tpu.pipeline_mode<synchronous>, transform_indices = @transform_2, window_bounds = array<i64: 1, 32>}, {transform_indices = @transform_3, window_bounds = array<i64: 32, 32>}]} {
    %c0 = arith.constant 0 : index
    %c0_0 = arith.constant 0 : index
    %0 = vector.load %arg2[%c0, %c0_0] : memref<32x32xbf16, #tpu.memory_space<vmem>>, vector<32x32xbf16>
    %c0_1 = arith.constant 0 : index
    %c0_2 = arith.constant 0 : index
    %1 = vector.load %arg3[%c0_1, %c0_2] : memref<32x32xbf16, #tpu.memory_space<vmem>>, vector<32x32xbf16>
    %cst = arith.constant dense<0.000000e+00> : vector<32x32xf32>
    %2 = tpu.matmul %0, %1, %cst {dimension_numbers = #tpu.dot_dimension_numbers<[1], [0], [0], [1], [0, 0, 1, 1], [], []>} : vector<32x32xbf16>, vector<32x32xbf16>, vector<32x32xf32> -> vector<32x32xf32>
    %c0_3 = arith.constant 0 : index
    %c0_4 = arith.constant 0 : index
    %3 = vector.load %arg4[%c0_3, %c0_4] : memref<1x32xf32, #tpu.memory_space<vmem>>, vector<1x32xf32>
    %4 = vector.broadcast %3 : vector<1x32xf32> to vector<32x32xf32>
    %5 = arith.addf %2, %4 : vector<32x32xf32>
    %6 = arith.truncf %5 : vector<32x32xf32> to vector<32x32xbf16>
    %c0_5 = arith.constant 0 : index
    %c0_6 = arith.constant 0 : index
    %7 = vector.load %arg5[%c0_5, %c0_6] : memref<32x32xbf16, #tpu.memory_space<vmem>>, vector<32x32xbf16>
    tpu.vector_store %arg5[%c0_5, %c0_6], %6 {strides = array<i32>} : memref<32x32xbf16, #tpu.memory_space<vmem>>, vector<32x32xbf16>,
    return
  }
  func.func @transform_0(%arg0: i32, %arg1: i32) -> (i32, i32) {
    %c0_i32 = arith.constant 0 : i32
    %c0_i32_0 = arith.constant 0 : i32
    return %arg1, %c0_i32 : i32, i32
  }
  func.func @transform_1(%arg0: i32, %arg1: i32) -> (i32, i32) {
    %c0_i32 = arith.constant 0 : i32
    %c0_i32_0 = arith.constant 0 : i32
    return %c0_i32, %arg0 : i32, i32
  }
  func.func @transform_2(%arg0: i32, %arg1: i32) -> (i32, i32) {
    %c0_i32 = arith.constant 0 : i32
    %c0_i32_0 = arith.constant 0 : i32
    return %c0_i32, %arg0 : i32, i32
  }
  func.func @transform_3(%arg0: i32, %arg1: i32) -> (i32, i32) {
    %c0_i32 = arith.constant 0 : i32
    return %arg1, %arg0 : i32, i32
  }
}

</mosaic_0001>

<llo_original>
// kernel: tpu_custom_call.1
$region0: #{tpu_custom_call.1}
  #allocation0 [shape = 'u32[]', space=smem, size = 0x4, offset = 0x4, fixed_abs, tag = 'smem constant byte address 0x4 - core index']
  #allocation1 [shape = 'u32[144,128]{1,0:T(1,128)}', space=vmem, size = 0x12000, scoped, tag = 'internal scratch']
  %s0 = inlined_call_operand.hbm [shape: bf16[32,32], index: 0, kind: input, shape index: {}]
  %s1 = inlined_call_operand.hbm [shape: bf16[32,32], index: 1, kind: input, shape index: {}]
  %s2 = inlined_call_operand.vmem [shape: f32[1,32], index: 2, kind: input, shape index: {}]
  %s3 = inlined_call_operand.hbm [shape: bf16[32,32], index: 3, kind: output, shape index: {}]
  %s4 = sld [smem:[#allocation0]]
  $region30: #{tpu_custom_call.1} parent=0
    _
  %s6 = ssub.s32 1, %s4
  %s7 = scalar_select 0, %s6, %s4
  $region1: #{tpu_custom_call.1} parent=0
    #allocation2 [shape = 'u8[8192]{0}', space=vmem, size = 0x2000, scoped, tag = 'input window, operand 0, single buffered']
    #allocation3 [shape = 's32[1]{0}', space=sflag, size = 0x4, scoped, tag = 'scoped memory for tpu_custom_call.1']
    #allocation4 [shape = 's32[1]{0}', space=sflag, size = 0x4, scoped, tag = 'scoped memory for tpu_custom_call.1']
    #allocation5 [shape = 'u8[8192]{0}', space=vmem, size = 0x2000, scoped, tag = 'input window, operand 1, single buffered']
    #allocation6 [shape = 's32[1]{0}', space=sflag, size = 0x4, scoped, tag = 'scoped memory for tpu_custom_call.1']
    #allocation7 [shape = 'u8[8192]{0}', space=vmem, size = 0x2000, scoped, tag = 'output window, operand 0, single buffered']
    %8 = vsyncpa [#allocation3], 0
    %9 = vsyncpa [#allocation6], 0
    %10 = vsyncpa [#allocation4], 0
    // Predicated region
    $region2: #{tpu_custom_call.1} parent=1 // pred_check
      _
    $region3: #{tpu_custom_call.1} parent=1 // pred_check_branch
      %12 = sbr.rel (0) target = $region5
    $region4: #{tpu_custom_call.1} parent=1 // pred_region
      %s14 = ssub.s32 256, 256
      %15 = vsyncadd [#allocation3], %s14
      %s16 = sshll.u32 [#allocation2], 4
      %s17 = int_to_ptr.vmem [resolvable:$true] %s16
      %22 = dma.hbm_to_vmem [thread:$0]  %s0, 256, %s17, [#allocation3], 64, 64, 4
    $region5: #{tpu_custom_call.1} parent=1 // pred_fallthru
      _
    // Predicated region
    $region6: #{tpu_custom_call.1} parent=1 // pred_check
      _
    $region7: #{tpu_custom_call.1} parent=1 // pred_check_branch
      %24 = sbr.rel (0) target = $region9
    $region8: #{tpu_custom_call.1} parent=1 // pred_region
      %s26 = ssub.s32 256, 256
      %27 = vsyncadd [#allocation6], %s26
      %s28 = sshll.u32 [#allocation5], 4
      %s29 = int_to_ptr.vmem [resolvable:$true] %s28
      %34 = dma.hbm_to_vmem [thread:$0]  %s1, 256, %s29, [#allocation6], 64, 64, 4
    $region9: #{tpu_custom_call.1} parent=1 // pred_fallthru
      _
    // Predicated region
    $region10: #{tpu_custom_call.1} parent=1 // pred_check
      _
    $region11: #{tpu_custom_call.1} parent=1 // pred_check_branch
      %36 = sbr.rel (0) target = $region13
    $region12: #{tpu_custom_call.1} parent=1 // pred_region
      _
    $region13: #{tpu_custom_call.1} parent=1 // pred_fallthru
      _
    // Predicated region
    $region14: #{tpu_custom_call.1} parent=1 // pred_check
      _
    $region15: #{tpu_custom_call.1} parent=1 // pred_check_branch
      %38 = sbr.rel (0) target = $region17
    $region16: #{tpu_custom_call.1} parent=1 // pred_region
      %39 = dma.done [#allocation3], 256
    $region17: #{tpu_custom_call.1} parent=1 // pred_fallthru
      _
    // Predicated region
    $region18: #{tpu_custom_call.1} parent=1 // pred_check
      _
    $region19: #{tpu_custom_call.1} parent=1 // pred_check_branch
      %41 = sbr.rel (0) target = $region21
    $region20: #{tpu_custom_call.1} parent=1 // pred_region
      %42 = dma.done [#allocation6], 256
    $region21: #{tpu_custom_call.1} parent=1 // pred_fallthru
      _
    %v44 = vld [vmem:[#allocation2] sm:$0xf]
    %v45 = vld [vmem:[#allocation2 + $0x4] sm:$0xf]
    %v46 = vld [vmem:[#allocation2 + $0x8] sm:$0xf]
    %v47 = vld [vmem:[#allocation2 + $0xc] sm:$0xf]
    %v48 = vld [vmem:[#allocation5] sm:$0xf]
    %v49 = vld [vmem:[#allocation5 + $0x4] sm:$0xf]
    %v50 = vld [vmem:[#allocation5 + $0x8] sm:$0xf]
    %v51 = vld [vmem:[#allocation5 + $0xc] sm:$0xf]
    %v52 = vld [vmem:[%s2] sm:$0x1]
    %v54 = vlaneseq
    %v55 = vshrl.u32 %v54, 7
    %v56 = vsub.s32 0, %v55
    %v57 = vrot.slane %v52, %v56
    %v63 = vunpack.c.l.b16 %v44
    %v64 = vunpack.c.l.b16 %v45
    %v65 = vunpack.c.l.b16 %v46
    %v66 = vunpack.c.l.b16 %v47
    %v67 = vpack.c.b16 %v64, %v63
    %v68 = vpack.c.b16 %v66, %v65
    %v73 = vunpack.c.l.b16 %v48
    %v74 = vunpack.c.l.b16 %v49
    %v75 = vunpack.c.l.b16 %v50
    %v76 = vunpack.c.l.b16 %v51
    %v77 = vpack.c.b16 %v74, %v73
    %v78 = vpack.c.b16 %v76, %v75
    %vm81 = vcmask 261120
    %v83 = vsel %vm81, %v67, 0
    %v86 = vsel %vm81, %v68, 0
    %88 = vmatprep.subr.bf16.mxu0 0
    %89 = vmatpush1.bf16.msra.mxu0 %v77
    %90 = vmatprep.subr.bf16.mxu0 0
    %91 = vmatpush1.bf16.msra.mxu0 %v78
    %92 = vmatprep.subr.bf16.mxu0 0
    %93 = vmatpush1.bf16.msra.mxu0 0
    %94 = vmatprep.subr.bf16.mxu0 0
    %95 = vmatpush1.bf16.msra.mxu0 0
    %96 = vmatprep.subr.bf16.mxu0 0
    %97 = vmatpush1.bf16.msra.mxu0 0
    %98 = vmatprep.subr.bf16.mxu0 0
    %99 = vmatpush1.bf16.msra.mxu0 0
    %100 = vmatprep.subr.bf16.mxu0 0
    %101 = vmatpush1.bf16.msra.mxu0 0
    %102 = vmatprep.subr.bf16.mxu0 0
    %103 = vmatpush1.bf16.msra.mxu0 0
    %104 = vmatprep.subr.bf16.mxu0 0
    %105 = vmatpush1.bf16.msra.mxu0 0
    %106 = vmatprep.subr.bf16.mxu0 0
    %107 = vmatpush1.bf16.msra.mxu0 0
    %108 = vmatprep.subr.bf16.mxu0 0
    %109 = vmatpush1.bf16.msra.mxu0 0
    %110 = vmatprep.subr.bf16.mxu0 0
    %111 = vmatpush1.bf16.msra.mxu0 0
    %112 = vmatprep.subr.bf16.mxu0 0
    %113 = vmatpush1.bf16.msra.mxu0 0
    %114 = vmatprep.subr.bf16.mxu0 0
    %115 = vmatpush1.bf16.msra.mxu0 0
    %116 = vmatprep.subr.bf16.mxu0 0
    %117 = vmatpush1.bf16.msra.mxu0 0
    %118 = vmatprep.subr.bf16.mxu0 0
    %119 = vmatpush1.bf16.msra.mxu0 0
    %120 = vmatprep.mubr.bf16.mxu0 0
    %121 = vmatmul.mubr.bf16.gmra.mrb[0].mxu0 %v83
    %v122 = vpop.f32.mrb[0].mxu0
    %v123 = vadd.f32 %v57, %v122
    %v124 = vpop.f32.mrb[0].mxu0
    %v125 = vpop.f32.mrb[0].mxu0
    %v126 = vadd.f32 %v57, %v125
    %v127 = vpop.f32.mrb[0].mxu0
    %128 = vmatprep.mubr.bf16.mxu0 0
    %129 = vmatmul.mubr.bf16.gmra.mrb[0].mxu0 %v86
    %v130 = vpop.f32.mrb[0].mxu0
    %v131 = vadd.f32 %v57, %v130
    %v132 = vpop.f32.mrb[0].mxu0
    %v133 = vpop.f32.mrb[0].mxu0
    %v134 = vadd.f32 %v57, %v133
    %v135 = vpop.f32.mrb[0].mxu0
    %136 = vdwg.mxu0
    %v137 = vpack.c.bf16 %v126, %v123
    %v138 = vpack.c.bf16 %v134, %v131
    %v141 = vunpack.c.l.b16 %v137
    %v142 = vunpack.c.h.b16 %v137
    %v143 = vunpack.c.l.b16 %v138
    %v144 = vunpack.c.h.b16 %v138
    %v145 = vpack.c.b16 %v141, %v141
    %v146 = vpack.c.b16 %v142, %v142
    %v147 = vpack.c.b16 %v143, %v143
    %v148 = vpack.c.b16 %v144, %v144
    %vm153 = vcmask 257024
    %154 = vst.msk [vmem:[#allocation7] sm:$0xf] %vm153, %v145
    %155 = vst.msk [vmem:[#allocation7 + $0x4] sm:$0xf] %vm153, %v146
    %156 = vst.msk [vmem:[#allocation7 + $0x8] sm:$0xf] %vm153, %v147
    %157 = vst.msk [vmem:[#allocation7 + $0xc] sm:$0xf] %vm153, %v148
    // Predicated region
    $region22: #{tpu_custom_call.1} parent=1 // pred_check
      _
    $region23: #{tpu_custom_call.1} parent=1 // pred_check_branch
      %159 = sbr.rel (0) target = $region25
    $region24: #{tpu_custom_call.1} parent=1 // pred_region
      %s161 = ssub.s32 256, 256
      %162 = vsyncadd [#allocation4], %s161
      %s163 = sshll.u32 [#allocation7], 4
      %s164 = int_to_ptr.vmem [resolvable:$true] %s163
      %169 = dma.vmem_to_hbm [thread:$0]  %s164, 256, %s3, [#allocation4], 64, 64, 4
    $region25: #{tpu_custom_call.1} parent=1 // pred_fallthru
      _
    // Predicated region
    $region26: #{tpu_custom_call.1} parent=1 // pred_check
      _
    $region27: #{tpu_custom_call.1} parent=1 // pred_check_branch
      %171 = sbr.rel (0) target = $region29
    $region28: #{tpu_custom_call.1} parent=1 // pred_region
      %172 = dma.done [#allocation4], 256
    $region29: #{tpu_custom_call.1} parent=1 // pred_fallthru
      _
    %173 = vsyncpa [#allocation3], 1
    %174 = vsyncpa [#allocation6], 1
    %175 = vsyncpa [#allocation4], 1

</llo_original>
